<compile_context>
chip_gen: v7x
topology: tpu7x:2x2x1
jax: 0.10.0
libtpu: 0.0.40
codegen_flags: <defaults>
</compile_context>

<pallas_src>
import math

import numpy as np

import jax
import jax.numpy as jnp
from jax.experimental import pallas as pl
from jax.experimental.pallas import tpu as pltpu


def _round_up(x: int, m: int) -> int:
    return ((x + m - 1) // m) * m


# ------------------------------ kernel bodies --------------------------------
# NOTE: kernels must not capture array constants -- all tables arrive as inputs.


def _phase_trick_kernel(t_ref, freqs_ref, phase_ref, o_ref):
    """General path: one full-width store, cos(x) == sin(x + pi/2)."""
    o_ref[...] = jnp.sin(t_ref[...] * freqs_ref[...] + phase_ref[...]).astype(o_ref.dtype)


def _split_kernel(t_ref, freqs_ref, o_ref):
    """half % 128 == 0: true sin/cos halves, both stores 128-lane aligned."""
    half = freqs_ref.shape[-1]
    e = t_ref[...] * freqs_ref[...]                     # (tb, half) VPU broadcast
    o_ref[:, :half] = jnp.sin(e).astype(o_ref.dtype)
    o_ref[:, half:] = jnp.cos(e).astype(o_ref.dtype)


def _packed_kernel(t_ref, onehot_ref, freqs_ref, phase_ref, o_ref):
    """Lane-dense small-dim path (dim < 128, 128 % dim == 0).

    r = 128 // dim timesteps are packed per 128-lane output row.  Each timestep
    is expanded across its dim lanes via exact f32 broadcast multiply-adds with
    a constant one-hot table (row j selects lanes [j*dim, (j+1)*dim)), keeping
    the output store full-width and unmasked.
    """
    r = onehot_ref.shape[0]
    t_exp = t_ref[:, 0:1] * onehot_ref[0:1, :]
    for j in range(1, r):
        t_exp = t_exp + t_ref[:, j:j + 1] * onehot_ref[j:j + 1, :]
    o_ref[...] = jnp.sin(t_exp * freqs_ref[...] + phase_ref[...]).astype(o_ref.dtype)


# ------------------------------ tiling helpers --------------------------------

_PER_BUFFER_BUDGET = 8 * 1024 * 1024   # <= 8 MiB per output buffer; double-buffered
                                       # that is 16 MiB, safe on v7x (64 MiB VMEM)
                                       # and on v5e/v6e with vmem_limit raised.


def _choose_row_tile(rows: int, row_bytes: int, sublane: int):
    """Row tile + 1-D grid for a (rows, cols) output with row_bytes per row."""
    max_rows = max(sublane,
                   (_PER_BUFFER_BUDGET // max(row_bytes, 1)) // sublane * sublane)
    out_bytes = rows * row_bytes
    if rows <= max_rows and (out_bytes < (1 << 20) or rows < 2 * sublane):
        # Tiny problem: one full-array block (each grid step costs ~0.35 us).
        return rows, (1,)
    # VMEM-budget-driven tile; guarantee >= 2 grid steps so the "parallel"
    # axis can shard across both v7x TensorCores when there is real work.
    tb = max(sublane, min(max_rows, _round_up(pl.cdiv(rows, 2), sublane)))
    return tb, (pl.cdiv(rows, tb),)


def _vmem_limit_bytes(tb: int, out_cols: int, out_itemsize: int, in_cols: int) -> int:
    need = (2 * tb * out_cols * out_itemsize      # double-buffered output tile
            + 2 * tb * in_cols * 4                # double-buffered time tile
            + 8 * out_cols * 4                    # constant tables
            + (4 << 20))                          # headroom
    return int(min(max(need, 16 << 20), 64 << 20))


# --------------------------------- wrapper ------------------------------------

def sinusoidal_position_embeddings(time: jax.Array, dim: int,
                                   out_dtype=jnp.float32) -> jax.Array:
    """time: (B,) floats -> (B, dim) = [sin(t*f), cos(t*f)] (DDPM embedding).

    Matches torch.cat((emb.sin(), emb.cos()), dim=-1) with
    emb = time[:, None] * exp(arange(dim//2) * -log(10000)/(dim//2 - 1)).
    """
    assert dim % 2 == 0 and dim >= 4, "dim must be even and >= 4"
    b = int(time.shape[0])
    half = dim // 2
    itemsize = jnp.dtype(out_dtype).itemsize
    sublane = 16 if itemsize == 2 else 8          # bf16 packs (16,128) native tiles

    # Trace-time constant tables (passed as kernel inputs, never captured).
    scale = -math.log(10000.0) / (half - 1)
    freqs = np.exp(np.arange(half, dtype=np.float32) * scale)            # (half,)
    freqs_full = np.concatenate([freqs, freqs]).reshape(1, dim)          # (1, dim)
    phase = np.concatenate([np.zeros(half, np.float32),
                            np.full(half, np.pi / 2.0, np.float32)]).reshape(1, dim)

    t_f32 = time.astype(jnp.float32)

    # -------- lane-dense packed path: dim < 128 (e.g. dim = 32) ---------------
    if dim < 128 and 128 % dim == 0:
        r = 128 // dim                               # timesteps per 128-lane row
        b_pad = _round_up(b, r)
        rows = b_pad // r
        t2d = jnp.pad(t_f32, (0, b_pad - b)).reshape(rows, r)
        onehot = np.zeros((r, 128), np.float32)
        for j in range(r):
            onehot[j, j * dim:(j + 1) * dim] = 1.0
        freqs_t = np.tile(freqs_full, (1, r))        # (1, 128)
        phase_t = np.tile(phase, (1, r))             # (1, 128)

        tb, grid = _choose_row_tile(rows, 128 * itemsize, sublane)
        out = pl.pallas_call(
            _packed_kernel,
            out_shape=jax.ShapeDtypeStruct((rows, 128), out_dtype),
            grid_spec=pl.GridSpec(
                grid=grid,
                in_specs=[pl.BlockSpec((tb, r), lambda i: (i, 0)),
                          pl.BlockSpec((r, 128), lambda i: (0, 0)),
                          pl.BlockSpec((1, 128), lambda i: (0, 0)),
                          pl.BlockSpec((1, 128), lambda i: (0, 0))],
                out_specs=pl.BlockSpec((tb, 128), lambda i: (i, 0)),
            ),
            compiler_params=pltpu.CompilerParams(
                dimension_semantics=("parallel",),
                vmem_limit_bytes=_vmem_limit_bytes(tb, 128, itemsize, r)),
            cost_estimate=pl.CostEstimate(
                flops=rows * 128 * (2 * r + 2),
                transcendentals=rows * 128,
                bytes_accessed=4 * rows * r + itemsize * rows * 128 + 4 * (r + 2) * 128),
        )(t2d, jnp.asarray(onehot), jnp.asarray(freqs_t), jnp.asarray(phase_t))
        # (rows, 128) -> (b_pad, dim) is a row-major view; drop the pad rows.
        return out.reshape(b_pad, dim)[:b]

    # -------------------------- general path: dim >= 128 ----------------------
    t2d = t_f32.reshape(b, 1)
    tb, grid = _choose_row_tile(b, dim * itemsize, sublane)
    compiler_params = pltpu.CompilerParams(
        dimension_semantics=("parallel",),
        vmem_limit_bytes=_vmem_limit_bytes(tb, dim, itemsize, 1))
    cost = pl.CostEstimate(
        flops=2 * b * dim,
        transcendentals=b * dim,
        bytes_accessed=4 * b + itemsize * b * dim + 8 * dim)

    if half % 128 == 0:
        # True sin/cos halves: both stores 128-aligned, no +pi/2 rounding error.
        return pl.pallas_call(
            _split_kernel,
            out_shape=jax.ShapeDtypeStruct((b, dim), out_dtype),
            grid_spec=pl.GridSpec(
                grid=grid,
                in_specs=[pl.BlockSpec((tb, 1), lambda i: (i, 0)),
                          pl.BlockSpec((1, half), lambda i: (0, 0))],
                out_specs=pl.BlockSpec((tb, dim), lambda i: (i, 0)),
            ),
            compiler_params=compiler_params,
            cost_estimate=cost,
        )(t2d, jnp.asarray(freqs.reshape(1, half)))

    # Fallback (e.g. dim == 128, or half not a multiple of 128): one full-width
    # unmasked store via cos(x) == sin(x + pi/2).
    return pl.pallas_call(
        _phase_trick_kernel,
        out_shape=jax.ShapeDtypeStruct((b, dim), out_dtype),
        grid_spec=pl.GridSpec(
            grid=grid,
            in_specs=[pl.BlockSpec((tb, 1), lambda i: (i, 0)),
                      pl.BlockSpec((1, dim), lambda i: (0, 0)),
                      pl.BlockSpec((1, dim), lambda i: (0, 0))],
            out_specs=pl.BlockSpec((tb, dim), lambda i: (i, 0)),
        ),
        compiler_params=compiler_params,
        cost_estimate=cost,
    )(t2d, jnp.asarray(freqs_full), jnp.asarray(phase))


# --------------------------------- reference ----------------------------------

def _reference(time: jax.Array, dim: int) -> jax.Array:
    half = dim // 2
    emb = math.log(10000.0) / (half - 1)
    emb = jnp.exp(jnp.arange(half, dtype=jnp.float32) * -emb)
    emb = time.astype(jnp.float32)[:, None] * emb[None, :]
    return jnp.concatenate([jnp.sin(emb), jnp.cos(emb)], axis=-1)


if __name__ == "__main__":
    key = jax.random.PRNGKey(0)
    batch = 8
    # Timesteps like DDPM would feed (non-negative floats up to ~1000).
    t_in = jax.random.uniform(key, (batch,), dtype=jnp.float32,
                              minval=0.0, maxval=1000.0)

    # dim=32 -> lane-dense packed path; dim=128 -> phase-trick path;
    # dim=256 -> true sin/cos split path.
    for dim in (32, 128, 256):
        out = jax.block_until_ready(sinusoidal_position_embeddings(t_in, dim))
        ref = _reference(t_in, dim)
        assert out.shape == (batch, dim)
        # Phase-trick paths compute cos(x) as sin(x + pi/2); for x ~ 1e3 the f32
        # rounding of (x + pi/2) contributes up to ~6e-5 absolute error.
        assert jnp.allclose(out, ref, atol=2e-4, rtol=1e-4), f"mismatch at dim={dim}"

    print("KERNEL_OK")
</pallas_src>

<mosaic_0001>
module attributes {stable_mosaic.version = 11 : i64} {
  func.func @_packed_kernel(%arg0: i32, %arg1: memref<2x4xf32, #tpu.memory_space<vmem>>, %arg2: memref<4x128xf32, #tpu.memory_space<vmem>>, %arg3: memref<1x128xf32, #tpu.memory_space<vmem>>, %arg4: memref<1x128xf32, #tpu.memory_space<vmem>>, %arg5: memref<2x128xf32, #tpu.memory_space<vmem>>) attributes {dimension_semantics = [#tpu.dimension_semantics<parallel>], iteration_bounds = array<i64: 1>, scalar_prefetch = 0 : i64, scratch_operands = 0 : i64, tpu.core_type = #tpu.core_type<tc>, window_params = [{transform_indices = @transform_0, window_bounds = array<i64: 2, 4>}, {pipeline_mode = #tpu.pipeline_mode<synchronous>, transform_indices = @transform_1, window_bounds = array<i64: 4, 128>}, {pipeline_mode = #tpu.pipeline_mode<synchronous>, transform_indices = @transform_2, window_bounds = array<i64: 1, 128>}, {pipeline_mode = #tpu.pipeline_mode<synchronous>, transform_indices = @transform_3, window_bounds = array<i64: 1, 128>}, {transform_indices = @transform_4, window_bounds = array<i64: 2, 128>}]} {
    %c0 = arith.constant 0 : index
    %c0_0 = arith.constant 0 : index
    %0 = vector.load %arg1[%c0, %c0_0] : memref<2x4xf32, #tpu.memory_space<vmem>>, vector<2x1xf32>
    %c0_1 = arith.constant 0 : index
    %c0_2 = arith.constant 0 : index
    %1 = vector.load %arg2[%c0_1, %c0_2] : memref<4x128xf32, #tpu.memory_space<vmem>>, vector<1x128xf32>
    %2 = vector.broadcast %0 : vector<2x1xf32> to vector<2x128xf32>
    %3 = vector.broadcast %1 : vector<1x128xf32> to vector<2x128xf32>
    %4 = arith.mulf %2, %3 : vector<2x128xf32>
    %c0_3 = arith.constant 0 : index
    %c1 = arith.constant 1 : index
    %5 = vector.load %arg1[%c0_3, %c1] : memref<2x4xf32, #tpu.memory_space<vmem>>, vector<2x1xf32>
    %c1_4 = arith.constant 1 : index
    %c0_5 = arith.constant 0 : index
    %6 = vector.load %arg2[%c1_4, %c0_5] : memref<4x128xf32, #tpu.memory_space<vmem>>, vector<1x128xf32>
    %7 = vector.broadcast %5 : vector<2x1xf32> to vector<2x128xf32>
    %8 = vector.broadcast %6 : vector<1x128xf32> to vector<2x128xf32>
    %9 = arith.mulf %7, %8 : vector<2x128xf32>
    %10 = arith.addf %4, %9 : vector<2x128xf32>
    %c0_6 = arith.constant 0 : index
    %c2 = arith.constant 2 : index
    %11 = vector.load %arg1[%c0_6, %c2] : memref<2x4xf32, #tpu.memory_space<vmem>>, vector<2x1xf32>
    %c2_7 = arith.constant 2 : index
    %c0_8 = arith.constant 0 : index
    %12 = vector.load %arg2[%c2_7, %c0_8] : memref<4x128xf32, #tpu.memory_space<vmem>>, vector<1x128xf32>
    %13 = vector.broadcast %11 : vector<2x1xf32> to vector<2x128xf32>
    %14 = vector.broadcast %12 : vector<1x128xf32> to vector<2x128xf32>
    %15 = arith.mulf %13, %14 : vector<2x128xf32>
    %16 = arith.addf %10, %15 : vector<2x128xf32>
    %c0_9 = arith.constant 0 : index
    %c3 = arith.constant 3 : index
    %17 = vector.load %arg1[%c0_9, %c3] : memref<2x4xf32, #tpu.memory_space<vmem>>, vector<2x1xf32>
    %c3_10 = arith.constant 3 : index
    %c0_11 = arith.constant 0 : index
    %18 = vector.load %arg2[%c3_10, %c0_11] : memref<4x128xf32, #tpu.memory_space<vmem>>, vector<1x128xf32>
    %19 = vector.broadcast %17 : vector<2x1xf32> to vector<2x128xf32>
    %20 = vector.broadcast %18 : vector<1x128xf32> to vector<2x128xf32>
    %21 = arith.mulf %19, %20 : vector<2x128xf32>
    %22 = arith.addf %16, %21 : vector<2x128xf32>
    %c0_12 = arith.constant 0 : index
    %c0_13 = arith.constant 0 : index
    %23 = vector.load %arg3[%c0_12, %c0_13] : memref<1x128xf32, #tpu.memory_space<vmem>>, vector<1x128xf32>
    %24 = vector.broadcast %23 : vector<1x128xf32> to vector<2x128xf32>
    %25 = arith.mulf %22, %24 : vector<2x128xf32>
    %c0_14 = arith.constant 0 : index
    %c0_15 = arith.constant 0 : index
    %26 = vector.load %arg4[%c0_14, %c0_15] : memref<1x128xf32, #tpu.memory_space<vmem>>, vector<1x128xf32>
    %27 = vector.broadcast %26 : vector<1x128xf32> to vector<2x128xf32>
    %28 = arith.addf %25, %27 : vector<2x128xf32>
    %29 = math.sin %28 : vector<2x128xf32>
    %c0_16 = arith.constant 0 : index
    %c0_17 = arith.constant 0 : index
    %30 = vector.load %arg5[%c0_16, %c0_17] : memref<2x128xf32, #tpu.memory_space<vmem>>, vector<2x128xf32>
    tpu.vector_store %arg5[%c0_16, %c0_17], %29 {strides = array<i32>} : memref<2x128xf32, #tpu.memory_space<vmem>>, vector<2x128xf32>,
    return
  }
  func.func @transform_0(%arg0: i32) -> (i32, i32) {
    %c0_i32 = arith.constant 0 : i32
    %c0_i32_0 = arith.constant 0 : i32
    return %arg0, %c0_i32 : i32, i32
  }
  func.func @transform_1(%arg0: i32) -> (i32, i32) {
    %c0_i32 = arith.constant 0 : i32
    %c0_i32_0 = arith.constant 0 : i32
    %c0_i32_1 = arith.constant 0 : i32
    return %c0_i32, %c0_i32_0 : i32, i32
  }
  func.func @transform_2(%arg0: i32) -> (i32, i32) {
    %c0_i32 = arith.constant 0 : i32
    %c0_i32_0 = arith.constant 0 : i32
    %c0_i32_1 = arith.constant 0 : i32
    return %c0_i32, %c0_i32_0 : i32, i32
  }
  func.func @transform_3(%arg0: i32) -> (i32, i32) {
    %c0_i32 = arith.constant 0 : i32
    %c0_i32_0 = arith.constant 0 : i32
    %c0_i32_1 = arith.constant 0 : i32
    return %c0_i32, %c0_i32_0 : i32, i32
  }
  func.func @transform_4(%arg0: i32) -> (i32, i32) {
    %c0_i32 = arith.constant 0 : i32
    %c0_i32_0 = arith.constant 0 : i32
    return %arg0, %c0_i32 : i32, i32
  }
}

</mosaic_0001>

<llo_original>
// kernel: tpu_custom_call.1
$region0: #{tpu_custom_call.1}
  #allocation0 [shape = 'u32[]', space=smem, size = 0x4, offset = 0x4, fixed_abs, tag = 'smem constant byte address 0x4 - core index']
  #allocation1 [shape = 'u32[144,128]{1,0:T(1,128)}', space=vmem, size = 0x12000, scoped, tag = 'internal scratch']
  %s0 = inlined_call_operand.hbm [shape: f32[2,4], index: 0, kind: input, shape index: {}]
  %s1 = inlined_call_operand.hbm [shape: f32[4,128], index: 1, kind: input, shape index: {}]
  %s2 = inlined_call_operand.vmem [shape: f32[1,128], index: 2, kind: input, shape index: {}]
  %s3 = inlined_call_operand.vmem [shape: f32[1,128], index: 3, kind: input, shape index: {}]
  %s4 = inlined_call_operand.hbm [shape: f32[2,128], index: 4, kind: output, shape index: {}]
  %s5 = sld [smem:[#allocation0]]
  $region34: #{tpu_custom_call.1} parent=0
    _
  %s7 = ssub.s32 1, %s5
  %s8 = scalar_select 0, %s7, %s5
  $region1: #{tpu_custom_call.1} parent=0
    #allocation2 [shape = 'u8[1024]{0}', space=vmem, size = 0x400, scoped, tag = 'input window, operand 0, single buffered']
    #allocation3 [shape = 's32[1]{0}', space=sflag, size = 0x4, scoped, tag = 'scoped memory for tpu_custom_call.1']
    #allocation4 [shape = 's32[1]{0}', space=sflag, size = 0x4, scoped, tag = 'scoped memory for tpu_custom_call.1']
    #allocation5 [shape = 'u8[2048]{0}', space=vmem, size = 0x800, scoped, tag = 'input window, operand 1, single buffered']
    #allocation6 [shape = 's32[1]{0}', space=sflag, size = 0x4, scoped, tag = 'scoped memory for tpu_custom_call.1']
    #allocation7 [shape = 'u8[1024]{0}', space=vmem, size = 0x400, scoped, tag = 'output window, operand 0, single buffered']
    %9 = vsyncpa [#allocation3], 0
    %10 = vsyncpa [#allocation6], 0
    %11 = vsyncpa [#allocation4], 0
    // Predicated region
    $region2: #{tpu_custom_call.1} parent=1 // pred_check
      _
    $region3: #{tpu_custom_call.1} parent=1 // pred_check_branch
      %13 = sbr.rel (0) target = $region5
    $region4: #{tpu_custom_call.1} parent=1 // pred_region
      %s15 = ssub.s32 32, 32
      %16 = vsyncadd [#allocation3], %s15
      %s18 = sshll.u32 [#allocation2], 4
      %s19 = int_to_ptr.vmem [resolvable:$true] %s18
      %21 = dma.hbm_to_vmem [thread:$0]  %s0, 32, %s19, [#allocation3]
    $region5: #{tpu_custom_call.1} parent=1 // pred_fallthru
      _
    // Predicated region
    $region6: #{tpu_custom_call.1} parent=1 // pred_check
      _
    $region7: #{tpu_custom_call.1} parent=1 // pred_check_branch
      %23 = sbr.rel (0) target = $region9
    $region8: #{tpu_custom_call.1} parent=1 // pred_region
      %s25 = ssub.s32 64, 64
      %26 = vsyncadd [#allocation6], %s25
      %s28 = sshll.u32 [#allocation5], 4
      %s29 = int_to_ptr.vmem [resolvable:$true] %s28
      %31 = dma.hbm_to_vmem [thread:$0]  %s1, 64, %s29, [#allocation6]
    $region9: #{tpu_custom_call.1} parent=1 // pred_fallthru
      _
    // Predicated region
    $region10: #{tpu_custom_call.1} parent=1 // pred_check
      _
    $region11: #{tpu_custom_call.1} parent=1 // pred_check_branch
      %33 = sbr.rel (0) target = $region13
    $region12: #{tpu_custom_call.1} parent=1 // pred_region
      _
    $region13: #{tpu_custom_call.1} parent=1 // pred_fallthru
      _
    // Predicated region
    $region14: #{tpu_custom_call.1} parent=1 // pred_check
      _
    $region15: #{tpu_custom_call.1} parent=1 // pred_check_branch
      %35 = sbr.rel (0) target = $region17
    $region16: #{tpu_custom_call.1} parent=1 // pred_region
      _
    $region17: #{tpu_custom_call.1} parent=1 // pred_fallthru
      _
    // Predicated region
    $region18: #{tpu_custom_call.1} parent=1 // pred_check
      _
    $region19: #{tpu_custom_call.1} parent=1 // pred_check_branch
      %37 = sbr.rel (0) target = $region21
    $region20: #{tpu_custom_call.1} parent=1 // pred_region
      %38 = dma.done [#allocation3], 32
    $region21: #{tpu_custom_call.1} parent=1 // pred_fallthru
      _
    // Predicated region
    $region22: #{tpu_custom_call.1} parent=1 // pred_check
      _
    $region23: #{tpu_custom_call.1} parent=1 // pred_check_branch
      %40 = sbr.rel (0) target = $region25
    $region24: #{tpu_custom_call.1} parent=1 // pred_region
      %41 = dma.done [#allocation6], 64
    $region25: #{tpu_custom_call.1} parent=1 // pred_fallthru
      _
    %v42 = vld [vmem:[#allocation2] sm:$0x3]
    %v43 = vld [vmem:[#allocation5] sm:$0x1]
    %45 = vset.pattern.permute.xlu0 0
    %46 = vperm.xlu0 %45, %v42
    %v47 = vpop.permute.xlu0 %46
    %v49 = vlaneseq
    %v50 = vshrl.u32 %v49, 7
    %v51 = vsub.s32 0, %v50
    %v52 = vrot.slane %v43, %v51
    %v53 = vmul.f32 %v47, %v52
    %v54 = vld [vmem:[#allocation5 + $0x1] sm:$0x1]
    %55 = vset.pattern.permute.xlu0 1
    %56 = vperm.xlu0 %55, %v42
    %v57 = vpop.permute.xlu0 %56
    %v59 = vlaneseq
    %v60 = vshrl.u32 %v59, 7
    %v61 = vsub.s32 0, %v60
    %v62 = vrot.slane %v54, %v61
    %v63 = vmul.f32 %v57, %v62
    %v64 = vadd.f32 %v53, %v63
    %v65 = vld [vmem:[#allocation5 + $0x2] sm:$0x1]
    %66 = vset.pattern.permute.xlu0 2
    %67 = vperm.xlu0 %66, %v42
    %v68 = vpop.permute.xlu0 %67
    %v70 = vlaneseq
    %v71 = vshrl.u32 %v70, 7
    %v72 = vsub.s32 0, %v71
    %v73 = vrot.slane %v65, %v72
    %v74 = vmul.f32 %v68, %v73
    %v75 = vadd.f32 %v64, %v74
    %v76 = vld [vmem:[#allocation5 + $0x3] sm:$0x1]
    %77 = vset.pattern.permute.xlu0 3
    %78 = vperm.xlu0 %77, %v42
    %v79 = vpop.permute.xlu0 %78
    %v81 = vlaneseq
    %v82 = vshrl.u32 %v81, 7
    %v83 = vsub.s32 0, %v82
    %v84 = vrot.slane %v76, %v83
    %v85 = vmul.f32 %v79, %v84
    %v86 = vadd.f32 %v75, %v85
    %v87 = vld [vmem:[%s2] sm:$0x1]
    %v89 = vlaneseq
    %v90 = vshrl.u32 %v89, 7
    %v91 = vsub.s32 0, %v90
    %v92 = vrot.slane %v87, %v91
    %v94 = vmul.f32 %v86, %v92
    %v95 = vld [vmem:[%s3] sm:$0x1]
    %v97 = vlaneseq
    %v98 = vshrl.u32 %v97, 7
    %v99 = vsub.s32 0, %v98
    %v100 = vrot.slane %v95, %v99
    %v102 = vadd.f32 %v94, %v100
    %v103 = vand.u32 2147483647, %v102
    %vm104 = vcmp.le.f32.partialorder %v103, 0.7853982
    %vm105 = vcmp.lt.s32.totalorder %v102, 0
    %v106 = vand.u32 %v102, 2139095040
    %v107 = vshrl.u32 %v106, 23
    %v108 = vsub.s32 %v107, 127
    %v109 = vand.u32 2147483647, %v102
    %v110 = vand.u32 %v109, 8388607
    %v111 = vor.u32 %v110, 8388608
    %v112 = vsub.s32 0, %v111
    %v113 = vadd.s32 %v108, 1
    %vm114 = vcmp.gt.s32.totalorder %v113, 0
    %v115 = vsel %vm114, %v113, 0
    %v116 = vshrl.u32 %v115, 5
    %v117 = vand.u32 %v115, 31
    %v118 = vsub.s32 32, %v117
    %v119 = vshrl.u32 683565275, %v118
    %v120 = vshll.u32 683565275, %v117
    %v121 = vshrl.u32 2475754826, %v118
    %v122 = vor.u32 %v120, %v121
    %v123 = vshll.u32 2475754826, %v117
    %v124 = vshrl.u32 2131351028, %v118
    %v125 = vor.u32 %v123, %v124
    %v126 = vshll.u32 2131351028, %v117
    %v127 = vshrl.u32 2102212464, %v118
    %v128 = vor.u32 %v126, %v127
    %v129 = vshll.u32 2102212464, %v117
    %v130 = vshrl.u32 920167782, %v118
    %v131 = vor.u32 %v129, %v130
    %v132 = vshll.u32 920167782, %v117
    %v133 = vshrl.u32 1326507024, %v118
    %v134 = vor.u32 %v132, %v133
    %vm135 = vcmp.lt.s32.totalorder %v116, 1
    %vm136 = vcmp.lt.s32.totalorder %v116, 2
    %vm137 = vcmp.lt.s32.totalorder %v116, 3
    %vm138 = vcmp.lt.s32.totalorder %v116, 4
    %v139 = vsel %vm135, %v119, %v122
    %v140 = vsel %vm138, %v128, 2102212464
    %v141 = vsel %vm137, %v125, %v140
    %v142 = vsel %vm136, %v139, %v141
    %v143 = vsel %vm135, %v122, %v125
    %v144 = vsel %vm138, %v131, 920167782
    %v145 = vsel %vm137, %v128, %v144
    %v146 = vsel %vm136, %v143, %v145
    %v147 = vsel %vm135, %v125, %v128
    %v148 = vsel %vm138, %v134, 1326507024
    %v149 = vsel %vm137, %v131, %v148
    %v150 = vsel %vm136, %v147, %v149
    %v151 = vshll.u32 %v111, 8
    %v152 = vmul.u32.u64.compose %v151, %v150
    %v153 = vextract.low.u32 %v152
    %v154 = vextract.high.u32 %v152
    %v155 = vmul.u32.u64.compose %v151, %v146
    %v156 = vextract.low.u32 %v155
    %v157 = vextract.high.u32 %v155
    %v158 = vmul.u32 %v151, %v142
    %v159 = vadd.s32 %v154, %v156
    %vm160 = vc.u32 %v154, %v156
    %v161 = vadd.s32 %v157, 1
    %v162 = vsel %vm160, %v161, %v157
    %v163 = vadd.s32 %v158, %v162
    %v164 = vadd.s32 %v163, 536870912
    %v165 = vshrl.u32 %v164, 30
    %v166 = vshll.u32 %v165, 30
    %v167 = vsub.s32 %v163, %v166
    %vm168 = vcmp.lt.s32.totalorder %v167, 0
    %v169 = vsub.s32 0, %v167
    %v170 = vsel %vm168, %v169, %v167
    %v171 = vclz %v170
    %v172 = vsub.s32 %v171, 2
    %vm173 = vcmp.gt.s32.totalorder 0, %v172
    %v174 = vsel %vm173, 0, %v172
    %v175 = vsub.s32 32, %v174
    %v176 = vshll.u32 %v167, %v174
    %v177 = vshrl.u32 %v159, %v175
    %v178 = vor.u32 %v176, %v177
    %v179 = vsub.s32 4294967266, %v174
    %v180 = vadd.s32 %v179, 127
    %v181 = vshll.u32 %v180, 23
    %v182 = vor.u32 4788187, %v181
    %v183 = vand.u32 2147483647, %v182
    %v185 = vcvt.s32.f32 %v178
    %v186 = vmul.f32 %v185, %v183
    %v187 = vxor.u32 %v186, 2147483648
    %v188 = vsel %vm105, %v187, %v186
    %v189 = vsub.s32 4, %v165
    %v190 = vsel %vm105, %v189, %v165
    %v191 = vsel %vm104, %v102, %v188
    %v192 = vsel %vm104, 0, %v190
    %v193 = vcosq.f32.pop %v191
    %v194 = vsinq.f32.pop %v191
    %vm195 = vweird.f32 %v102
    %v196 = vadd.s32 %v192, 3
    %v197 = vand.u32 %v196, 3
    %vm198 = vcmp.lt.s32.totalorder %v197, 2
    %vm199 = vcmp.eq.s32.totalorder %v197, 0
    %v200 = vxor.u32 %v194, 2147483648
    %v201 = vsel %vm199, %v193, %v200
    %vm202 = vcmp.eq.s32.totalorder %v197, 2
    %v203 = vxor.u32 %v193, 2147483648
    %v204 = vsel %vm202, %v203, %v194
    %v205 = vsel %vm198, %v201, %v204
    %v206 = vsel %vm195, nan, %v205
    %207 = vst [vmem:[#allocation7] sm:$0x3] %v206
    // Predicated region
    $region26: #{tpu_custom_call.1} parent=1 // pred_check
      _
    $region27: #{tpu_custom_call.1} parent=1 // pred_check_branch
      %209 = sbr.rel (0) target = $region29
    $region28: #{tpu_custom_call.1} parent=1 // pred_region
      %s211 = ssub.s32 32, 32
      %212 = vsyncadd [#allocation4], %s211
      %s214 = sshll.u32 [#allocation7], 4
      %s215 = int_to_ptr.vmem [resolvable:$true] %s214
      %217 = dma.vmem_to_hbm [thread:$0]  %s215, 32, %s4, [#allocation4]
    $region29: #{tpu_custom_call.1} parent=1 // pred_fallthru
      _
    // Predicated region
    $region30: #{tpu_custom_call.1} parent=1 // pred_check
      _
    $region31: #{tpu_custom_call.1} parent=1 // pred_check_branch
      %219 = sbr.rel (0) target = $region33
    $region32: #{tpu_custom_call.1} parent=1 // pred_region
      %220 = dma.done [#allocation4], 32
    $region33: #{tpu_custom_call.1} parent=1 // pred_fallthru
      _
    %221 = vsyncpa [#allocation3], 1
    %222 = vsyncpa [#allocation6], 1
    %223 = vsyncpa [#allocation4], 1

</llo_original>
